<compile_context>
chip_gen: v7x
topology: tpu7x:2x2x1
jax: 0.10.0
libtpu: 0.0.40
codegen_flags: <defaults>
</compile_context>

<pallas_src>
import jax
import jax.numpy as jnp
from jax.experimental import pallas as pl
from jax.experimental.pallas import tpu as pltpu


def _round_up(n: int, m: int) -> int:
    return ((n + m - 1) // m) * m


_TB_CAP = 2048          # safe on v5e's single EUP (tanh); amortizes ~0.35us/step cost
_MULTI_TILE_MIN_B = 64  # force >=2 grid steps once batch is big enough (v7x 2 TCs)


def classifier_kernel(x_ref, w1_ref, b1_ref, w2_ref, b2_ref, o_ref):
    # x: (TB, K) f32 streamed tile -> bf16 in-kernel (VPU cast, hidden under DMA).
    xb = x_ref[...].astype(jnp.bfloat16)
    # dense1: MXU matmul with f32 accumulation; bias add + tanh stay f32.
    h = jnp.dot(xb, w1_ref[...], preferred_element_type=jnp.float32) + b1_ref[...]
    h = jnp.tanh(h)                                    # EUP slot
    # dense2 against the 128-padded weight (clean MXU tile), then keep only the
    # real num_labels columns for the store (masked vst, but 42x fewer HBM bytes).
    full = jnp.dot(h.astype(jnp.bfloat16), w2_ref[...],
                   preferred_element_type=jnp.float32)
    nl = o_ref.shape[-1]
    o_ref[...] = full[:, :nl] + b2_ref[...]


def prepare_classifier_params(w1, b1, w2, b2):
    """One-time pad + bf16 cast of the weights (hoisted out of the forward path).

    w1: [in_feat, hid]      (dense1.weight.T)   b1: [1, hid]
    w2: [hid, num_labels]   (dense2.weight.T)   b2: [1, num_labels]
    """
    K, H = w1.shape
    NL = w2.shape[1]
    H_pad = _round_up(H, 128)
    N_pad = _round_up(NL, 128)
    w1p = jnp.zeros((K, H_pad), jnp.bfloat16).at[:, :H].set(w1.astype(jnp.bfloat16))
    b1p = jnp.zeros((1, H_pad), jnp.float32).at[:, :H].set(b1.astype(jnp.float32))
    w2p = jnp.zeros((H_pad, N_pad), jnp.bfloat16).at[:H, :NL].set(
        w2.astype(jnp.bfloat16))
    b2p = b2.astype(jnp.float32).reshape(1, NL)  # unpadded: defines true output width
    return w1p, b1p, w2p, b2p


def _choose_batch_tiling(B: int):
    B8 = _round_up(B, 8)
    n_tiles = max(1, -(-B8 // _TB_CAP))
    if B8 >= _MULTI_TILE_MIN_B:
        n_tiles = max(n_tiles, 2)          # keep both v7x TCs busy / pipeline alive
    TB = _round_up(-(-B8 // n_tiles), 8)   # padding waste bounded by <8 rows/tile
    return TB, n_tiles, TB * n_tiles


@jax.jit
def classifier_forward(x, w1p, b1p, w2p, b2p):
    """Eval-mode forward of Classifier.

    x: [B, in_feat] f32; padded params from prepare_classifier_params().
    Returns [B, num_labels] f32.
    """
    B, K = x.shape
    H_pad = w1p.shape[1]
    N_pad = w2p.shape[1]
    NL = b2p.shape[1]

    TB, n_tiles, B_pad = _choose_batch_tiling(B)
    x_in = x if B_pad == B else jnp.pad(x, ((0, B_pad - B), (0, 0)))

    flops = 2 * B_pad * (K * H_pad + H_pad * N_pad)
    bytes_accessed = (B_pad * K * 4 + w1p.size * 2 + b1p.size * 4
                      + w2p.size * 2 + b2p.size * 4 + B_pad * NL * 4)

    out = pl.pallas_call(
        classifier_kernel,
        out_shape=jax.ShapeDtypeStruct((B_pad, NL), jnp.float32),
        grid=(n_tiles,),
        in_specs=[
            # x streams per batch tile (full K as last dim -> no feature padding).
            pl.BlockSpec((TB, K), lambda i: (i, 0)),
            # Weights / biases resident in VMEM across the grid.
            pl.BlockSpec((K, H_pad), lambda i: (0, 0)),
            pl.BlockSpec((1, H_pad), lambda i: (0, 0)),
            pl.BlockSpec((H_pad, N_pad), lambda i: (0, 0)),
            pl.BlockSpec((1, NL), lambda i: (0, 0)),
        ],
        # Narrow, true-NL output block: writes only the real label columns.
        out_specs=pl.BlockSpec((TB, NL), lambda i: (i, 0)),
        compiler_params=pltpu.CompilerParams(
            dimension_semantics=("parallel",),
        ),
        cost_estimate=pl.CostEstimate(
            flops=flops,
            transcendentals=B_pad * H_pad,
            bytes_accessed=bytes_accessed,
        ),
    )(x_in, w1p, b1p, w2p, b2p)

    return out if B_pad == B else out[:B]


def init_params(key, in_feat, num_labels):
    """Deterministic PyTorch-nn.Linear-style init (uniform +/- 1/sqrt(fan_in))."""
    hid = in_feat // 2
    k1, k2, k3, k4 = jax.random.split(key, 4)
    bound1 = 1.0 / jnp.sqrt(in_feat)
    bound2 = 1.0 / jnp.sqrt(hid)
    # stored pre-transposed: [in, out]
    w1 = jax.random.uniform(k1, (in_feat, hid), jnp.float32, -bound1, bound1)
    b1 = jax.random.uniform(k2, (1, hid), jnp.float32, -bound1, bound1)
    w2 = jax.random.uniform(k3, (hid, num_labels), jnp.float32, -bound2, bound2)
    b2 = jax.random.uniform(k4, (1, num_labels), jnp.float32, -bound2, bound2)
    return w1, b1, w2, b2


if __name__ == "__main__":
    key = jax.random.PRNGKey(0)
    B, in_feat, num_labels = 8, 100, 3  # module defaults: in_feat=100, 3 labels

    kx, kp = jax.random.split(key)
    x = jax.random.normal(kx, (B, in_feat), jnp.float32)
    w1, b1, w2, b2 = init_params(kp, in_feat, num_labels)

    # One-time weight preparation (padding + bf16 cast hoisted out of forward).
    params = prepare_classifier_params(w1, b1, w2, b2)

    out = classifier_forward(x, *params)
    out = jax.block_until_ready(out)

    # pure-JAX f32 reference (dropout = identity in eval mode); kernel uses bf16
    # operands with f32 accumulation, so allow a modest tolerance.
    ref = jnp.tanh(x @ w1 + b1) @ w2 + b2
    assert out.shape == (B, num_labels), out.shape
    assert jnp.all(jnp.isfinite(out))
    assert jnp.allclose(out, ref, atol=3e-2, rtol=3e-2), (
        float(jnp.max(jnp.abs(out - ref))))

    print("KERNEL_OK")
</pallas_src>

<mosaic_0001>
module attributes {stable_mosaic.version = 11 : i64} {
  func.func @classifier_kernel(%arg0: i32, %arg1: memref<8x100xf32, #tpu.memory_space<vmem>>, %arg2: memref<100x128xbf16, #tpu.memory_space<vmem>>, %arg3: memref<1x128xf32, #tpu.memory_space<vmem>>, %arg4: memref<128x128xbf16, #tpu.memory_space<vmem>>, %arg5: memref<1x3xf32, #tpu.memory_space<vmem>>, %arg6: memref<8x3xf32, #tpu.memory_space<vmem>>) attributes {dimension_semantics = [#tpu.dimension_semantics<parallel>], iteration_bounds = array<i64: 1>, scalar_prefetch = 0 : i64, scratch_operands = 0 : i64, tpu.core_type = #tpu.core_type<tc>, window_params = [{transform_indices = @transform_0, window_bounds = array<i64: 8, 100>}, {pipeline_mode = #tpu.pipeline_mode<synchronous>, transform_indices = @transform_1, window_bounds = array<i64: 100, 128>}, {pipeline_mode = #tpu.pipeline_mode<synchronous>, transform_indices = @transform_2, window_bounds = array<i64: 1, 128>}, {pipeline_mode = #tpu.pipeline_mode<synchronous>, transform_indices = @transform_3, window_bounds = array<i64: 128, 128>}, {pipeline_mode = #tpu.pipeline_mode<synchronous>, transform_indices = @transform_4, window_bounds = array<i64: 1, 3>}, {transform_indices = @transform_5, window_bounds = array<i64: 8, 3>}]} {
    %c0 = arith.constant 0 : index
    %c0_0 = arith.constant 0 : index
    %0 = vector.load %arg1[%c0, %c0_0] : memref<8x100xf32, #tpu.memory_space<vmem>>, vector<8x100xf32>
    %1 = arith.truncf %0 : vector<8x100xf32> to vector<8x100xbf16>
    %c0_1 = arith.constant 0 : index
    %c0_2 = arith.constant 0 : index
    %2 = vector.load %arg2[%c0_1, %c0_2] : memref<100x128xbf16, #tpu.memory_space<vmem>>, vector<100x128xbf16>
    %cst = arith.constant dense<0.000000e+00> : vector<8x128xf32>
    %3 = tpu.matmul %1, %2, %cst {dimension_numbers = #tpu.dot_dimension_numbers<[1], [0], [0], [1], [0, 0, 1, 1], [], []>} : vector<8x100xbf16>, vector<100x128xbf16>, vector<8x128xf32> -> vector<8x128xf32>
    %c0_3 = arith.constant 0 : index
    %c0_4 = arith.constant 0 : index
    %4 = vector.load %arg3[%c0_3, %c0_4] : memref<1x128xf32, #tpu.memory_space<vmem>>, vector<1x128xf32>
    %5 = vector.broadcast %4 : vector<1x128xf32> to vector<8x128xf32>
    %6 = arith.addf %3, %5 : vector<8x128xf32>
    %7 = math.tanh %6 : vector<8x128xf32>
    %8 = arith.truncf %7 : vector<8x128xf32> to vector<8x128xbf16>
    %c0_5 = arith.constant 0 : index
    %c0_6 = arith.constant 0 : index
    %9 = vector.load %arg4[%c0_5, %c0_6] : memref<128x128xbf16, #tpu.memory_space<vmem>>, vector<128x128xbf16>
    %cst_7 = arith.constant dense<0.000000e+00> : vector<8x128xf32>
    %10 = tpu.matmul %8, %9, %cst_7 {dimension_numbers = #tpu.dot_dimension_numbers<[1], [0], [0], [1], [0, 0, 1, 1], [], []>} : vector<8x128xbf16>, vector<128x128xbf16>, vector<8x128xf32> -> vector<8x128xf32>
    %11 = vector.extract_strided_slice %10 {offsets = [0, 0], sizes = [8, 3], strides = [1, 1]} : vector<8x128xf32> to vector<8x3xf32>
    %c0_8 = arith.constant 0 : index
    %c0_9 = arith.constant 0 : index
    %12 = vector.load %arg5[%c0_8, %c0_9] : memref<1x3xf32, #tpu.memory_space<vmem>>, vector<1x3xf32>
    %13 = vector.broadcast %12 : vector<1x3xf32> to vector<8x3xf32>
    %14 = arith.addf %11, %13 : vector<8x3xf32>
    %c0_10 = arith.constant 0 : index
    %c0_11 = arith.constant 0 : index
    %15 = vector.load %arg6[%c0_10, %c0_11] : memref<8x3xf32, #tpu.memory_space<vmem>>, vector<8x3xf32>
    tpu.vector_store %arg6[%c0_10, %c0_11], %14 {strides = array<i32>} : memref<8x3xf32, #tpu.memory_space<vmem>>, vector<8x3xf32>,
    return
  }
  func.func @transform_0(%arg0: i32) -> (i32, i32) {
    %c0_i32 = arith.constant 0 : i32
    %c0_i32_0 = arith.constant 0 : i32
    return %arg0, %c0_i32 : i32, i32
  }
  func.func @transform_1(%arg0: i32) -> (i32, i32) {
    %c0_i32 = arith.constant 0 : i32
    %c0_i32_0 = arith.constant 0 : i32
    %c0_i32_1 = arith.constant 0 : i32
    return %c0_i32, %c0_i32_0 : i32, i32
  }
  func.func @transform_2(%arg0: i32) -> (i32, i32) {
    %c0_i32 = arith.constant 0 : i32
    %c0_i32_0 = arith.constant 0 : i32
    %c0_i32_1 = arith.constant 0 : i32
    return %c0_i32, %c0_i32_0 : i32, i32
  }
  func.func @transform_3(%arg0: i32) -> (i32, i32) {
    %c0_i32 = arith.constant 0 : i32
    %c0_i32_0 = arith.constant 0 : i32
    %c0_i32_1 = arith.constant 0 : i32
    return %c0_i32, %c0_i32_0 : i32, i32
  }
  func.func @transform_4(%arg0: i32) -> (i32, i32) {
    %c0_i32 = arith.constant 0 : i32
    %c0_i32_0 = arith.constant 0 : i32
    %c0_i32_1 = arith.constant 0 : i32
    return %c0_i32, %c0_i32_0 : i32, i32
  }
  func.func @transform_5(%arg0: i32) -> (i32, i32) {
    %c0_i32 = arith.constant 0 : i32
    %c0_i32_0 = arith.constant 0 : i32
    return %arg0, %c0_i32 : i32, i32
  }
}

</mosaic_0001>

<llo_original>
// kernel: classifier_forward.1
$region0: #{classifier_forward.1}
  #allocation0 [shape = 'u32[]', space=smem, size = 0x4, offset = 0x4, fixed_abs, tag = 'smem constant byte address 0x4 - core index']
  #allocation1 [shape = 'u32[144,128]{1,0:T(1,128)}', space=vmem, size = 0x12000, scoped, tag = 'internal scratch']
  %s0 = inlined_call_operand.hbm [shape: f32[8,100], index: 0, kind: input, shape index: {}]
  %s1 = inlined_call_operand.hbm [shape: bf16[100,128], index: 1, kind: input, shape index: {}]
  %s2 = inlined_call_operand.vmem [shape: f32[1,128], index: 2, kind: input, shape index: {}]
  %s3 = inlined_call_operand.hbm [shape: bf16[128,128], index: 3, kind: input, shape index: {}]
  %s4 = inlined_call_operand.vmem [shape: f32[1,3], index: 4, kind: input, shape index: {}]
  %s5 = inlined_call_operand.vmem [shape: f32[8,3], index: 5, kind: output, shape index: {}]
  %s6 = sld [smem:[#allocation0]]
  $region42: #{classifier_forward.1} parent=0
    _
  %s8 = ssub.s32 1, %s6
  %s9 = scalar_select 0, %s8, %s6
  $region1: #{classifier_forward.1} parent=0
    #allocation2 [shape = 'u8[4096]{0}', space=vmem, size = 0x1000, scoped, tag = 'input window, operand 0, single buffered']
    #allocation3 [shape = 's32[1]{0}', space=sflag, size = 0x4, scoped, tag = 'scoped memory for classifier_forward.1']
    #allocation4 [shape = 'u8[26624]{0}', space=vmem, size = 0x6800, scoped, tag = 'input window, operand 1, single buffered']
    #allocation5 [shape = 's32[1]{0}', space=sflag, size = 0x4, scoped, tag = 'scoped memory for classifier_forward.1']
    #allocation6 [shape = 'u8[32768]{0}', space=vmem, size = 0x8000, scoped, tag = 'input window, operand 3, single buffered']
    %10 = vsyncpa [#allocation3], 0
    %11 = vsyncpa [#allocation5], 0
    // Predicated region
    $region2: #{classifier_forward.1} parent=1 // pred_check
      _
    $region3: #{classifier_forward.1} parent=1 // pred_check_branch
      %13 = sbr.rel (0) target = $region5
    $region4: #{classifier_forward.1} parent=1 // pred_region
      %s15 = ssub.s32 128, 128
      %16 = vsyncadd [#allocation3], %s15
      %s18 = sshll.u32 [#allocation2], 4
      %s19 = int_to_ptr.vmem [resolvable:$true] %s18
      %21 = dma.hbm_to_vmem [thread:$0]  %s0, 128, %s19, [#allocation3]
    $region5: #{classifier_forward.1} parent=1 // pred_fallthru
      _
    // Predicated region
    $region6: #{classifier_forward.1} parent=1 // pred_check
      _
    $region7: #{classifier_forward.1} parent=1 // pred_check_branch
      %23 = sbr.rel (0) target = $region9
    $region8: #{classifier_forward.1} parent=1 // pred_region
      %s25 = ssub.s32 832, 832
      %26 = vsyncadd [#allocation5], %s25
      %s27 = sshll.u32 [#allocation4], 4
      %s28 = int_to_ptr.vmem [resolvable:$true] %s27
      %33 = dma.hbm_to_vmem [thread:$0]  %s1, 832, %s28, [#allocation5], 64, 64, 4
    $region9: #{classifier_forward.1} parent=1 // pred_fallthru
      _
    // Predicated region
    $region10: #{classifier_forward.1} parent=1 // pred_check
      _
    $region11: #{classifier_forward.1} parent=1 // pred_check_branch
      %35 = sbr.rel (0) target = $region13
    $region12: #{classifier_forward.1} parent=1 // pred_region
      _
    $region13: #{classifier_forward.1} parent=1 // pred_fallthru
      _
    // Predicated region
    $region14: #{classifier_forward.1} parent=1 // pred_check
      _
    $region15: #{classifier_forward.1} parent=1 // pred_check_branch
      %37 = sbr.rel (0) target = $region17
    $region16: #{classifier_forward.1} parent=1 // pred_region
      %s39 = ssub.s32 1024, 1024
      %40 = vsyncadd [#allocation5], %s39
      %s41 = sshll.u32 [#allocation6], 4
      %s42 = int_to_ptr.vmem [resolvable:$true] %s41
      %47 = dma.hbm_to_vmem [thread:$0]  %s3, 1024, %s42, [#allocation5], 64, 64, 4
    $region17: #{classifier_forward.1} parent=1 // pred_fallthru
      _
    // Predicated region
    $region18: #{classifier_forward.1} parent=1 // pred_check
      _
    $region19: #{classifier_forward.1} parent=1 // pred_check_branch
      %49 = sbr.rel (0) target = $region21
    $region20: #{classifier_forward.1} parent=1 // pred_region
      _
    $region21: #{classifier_forward.1} parent=1 // pred_fallthru
      _
    // Predicated region
    $region22: #{classifier_forward.1} parent=1 // pred_check
      _
    $region23: #{classifier_forward.1} parent=1 // pred_check_branch
      %51 = sbr.rel (0) target = $region25
    $region24: #{classifier_forward.1} parent=1 // pred_region
      %52 = dma.done [#allocation3], 128
    $region25: #{classifier_forward.1} parent=1 // pred_fallthru
      _
    // Predicated region
    $region26: #{classifier_forward.1} parent=1 // pred_check
      _
    $region27: #{classifier_forward.1} parent=1 // pred_check_branch
      %54 = sbr.rel (0) target = $region29
    $region28: #{classifier_forward.1} parent=1 // pred_region
      %55 = dma.done [#allocation5], 832
    $region29: #{classifier_forward.1} parent=1 // pred_fallthru
      _
    // Predicated region
    $region30: #{classifier_forward.1} parent=1 // pred_check
      _
    $region31: #{classifier_forward.1} parent=1 // pred_check_branch
      %57 = sbr.rel (0) target = $region33
    $region32: #{classifier_forward.1} parent=1 // pred_region
      %58 = dma.done [#allocation5], 1024
    $region33: #{classifier_forward.1} parent=1 // pred_fallthru
      _
    %v60 = vld [vmem:[#allocation2] sm:$0xff]
    %v61 = vpack.c.bf16 %v60, %v60
    %v62 = vld [vmem:[#allocation4] sm:$0xf]
    %v63 = vld [vmem:[#allocation4 + $0x4] sm:$0xf]
    %v64 = vld [vmem:[#allocation4 + $0x8] sm:$0xf]
    %v65 = vld [vmem:[#allocation4 + $0xc] sm:$0xf]
    %v66 = vld [vmem:[#allocation4 + $0x10] sm:$0xf]
    %v67 = vld [vmem:[#allocation4 + $0x14] sm:$0xf]
    %v68 = vld [vmem:[#allocation4 + $0x18] sm:$0xf]
    %v69 = vld [vmem:[#allocation4 + $0x1c] sm:$0xf]
    %v70 = vld [vmem:[#allocation4 + $0x20] sm:$0xf]
    %v71 = vld [vmem:[#allocation4 + $0x24] sm:$0xf]
    %v72 = vld [vmem:[#allocation4 + $0x28] sm:$0xf]
    %v73 = vld [vmem:[#allocation4 + $0x2c] sm:$0xf]
    %v74 = vld [vmem:[#allocation4 + $0x30] sm:$0x3]
    %v75 = vld [vmem:[%s2] sm:$0x1]
    %v77 = vlaneseq
    %v78 = vshrl.u32 %v77, 7
    %v79 = vsub.s32 0, %v78
    %v80 = vrot.slane %v75, %v79
    %v95 = vunpack.c.l.b16 %v62
    %v96 = vunpack.c.l.b16 %v63
    %v97 = vunpack.c.l.b16 %v64
    %v98 = vunpack.c.l.b16 %v65
    %v99 = vunpack.c.l.b16 %v66
    %v100 = vunpack.c.l.b16 %v67
    %v101 = vunpack.c.l.b16 %v68
    %v102 = vunpack.c.l.b16 %v69
    %v103 = vunpack.c.l.b16 %v70
    %v104 = vunpack.c.l.b16 %v71
    %v105 = vunpack.c.l.b16 %v72
    %v106 = vunpack.c.l.b16 %v73
    %v107 = vunpack.c.l.b16 %v74
    %v108 = vpack.c.b16 %v96, %v95
    %v109 = vpack.c.b16 %v98, %v97
    %v110 = vpack.c.b16 %v100, %v99
    %v111 = vpack.c.b16 %v102, %v101
    %v112 = vpack.c.b16 %v104, %v103
    %v113 = vpack.c.b16 %v106, %v105
    %v114 = vpack.c.b16 %v107, %v107
    %vm121 = vcmask 818176
    %v123 = vsel %vm121, %v61, 0
    %vm125 = vcmask 1041408
    %v127 = vsel %vm125, %v114, 0
    %129 = vmatprep.subr.bf16.mxu0 0
    %130 = vmatpush1.bf16.msra.mxu0 %v108
    %131 = vmatprep.subr.bf16.mxu0 0
    %132 = vmatpush1.bf16.msra.mxu0 %v109
    %133 = vmatprep.subr.bf16.mxu0 0
    %134 = vmatpush1.bf16.msra.mxu0 %v110
    %135 = vmatprep.subr.bf16.mxu0 0
    %136 = vmatpush1.bf16.msra.mxu0 %v111
    %137 = vmatprep.subr.bf16.mxu0 0
    %138 = vmatpush1.bf16.msra.mxu0 %v112
    %139 = vmatprep.subr.bf16.mxu0 0
    %140 = vmatpush1.bf16.msra.mxu0 %v113
    %141 = vmatprep.subr.bf16.mxu0 0
    %142 = vmatpush1.bf16.msra.mxu0 %v127
    %143 = vmatprep.subr.bf16.mxu0 0
    %144 = vmatpush1.bf16.msra.mxu0 0
    %145 = vmatprep.subr.bf16.mxu0 0
    %146 = vmatpush1.bf16.msra.mxu0 0
    %147 = vmatprep.subr.bf16.mxu0 0
    %148 = vmatpush1.bf16.msra.mxu0 0
    %149 = vmatprep.subr.bf16.mxu0 0
    %150 = vmatpush1.bf16.msra.mxu0 0
    %151 = vmatprep.subr.bf16.mxu0 0
    %152 = vmatpush1.bf16.msra.mxu0 0
    %153 = vmatprep.subr.bf16.mxu0 0
    %154 = vmatpush1.bf16.msra.mxu0 0
    %155 = vmatprep.subr.bf16.mxu0 0
    %156 = vmatpush1.bf16.msra.mxu0 0
    %157 = vmatprep.subr.bf16.mxu0 0
    %158 = vmatpush1.bf16.msra.mxu0 0
    %159 = vmatprep.subr.bf16.mxu0 0
    %160 = vmatpush1.bf16.msra.mxu0 0
    %161 = vmatprep.mubr.bf16.mxu0 0
    %162 = vmatmul.mubr.bf16.gmra.mrb[0].mxu0 %v123
    %v163 = vpop.f32.mrb[0].mxu0
    %v164 = vadd.f32 %v80, %v163
    %v165 = vpop.f32.mrb[0].mxu0
    %v166 = vpop.f32.mrb[0].mxu0
    %v167 = vpop.f32.mrb[0].mxu0
    %168 = vdwg.mxu0
    %v169 = vtanh.pop %v164
    %v170 = vpack.c.bf16 %v169, %v169
    %v171 = vld [vmem:[#allocation6] sm:$0xf]
    %v172 = vld [vmem:[#allocation6 + $0x4] sm:$0xf]
    %v173 = vld [vmem:[#allocation6 + $0x8] sm:$0xf]
    %v174 = vld [vmem:[#allocation6 + $0xc] sm:$0xf]
    %v175 = vld [vmem:[#allocation6 + $0x10] sm:$0xf]
    %v176 = vld [vmem:[#allocation6 + $0x14] sm:$0xf]
    %v177 = vld [vmem:[#allocation6 + $0x18] sm:$0xf]
    %v178 = vld [vmem:[#allocation6 + $0x1c] sm:$0xf]
    %v179 = vld [vmem:[#allocation6 + $0x20] sm:$0xf]
    %v180 = vld [vmem:[#allocation6 + $0x24] sm:$0xf]
    %v181 = vld [vmem:[#allocation6 + $0x28] sm:$0xf]
    %v182 = vld [vmem:[#allocation6 + $0x2c] sm:$0xf]
    %v183 = vld [vmem:[#allocation6 + $0x30] sm:$0xf]
    %v184 = vld [vmem:[#allocation6 + $0x34] sm:$0xf]
    %v185 = vld [vmem:[#allocation6 + $0x38] sm:$0xf]
    %v186 = vld [vmem:[#allocation6 + $0x3c] sm:$0xf]
    %v203 = vunpack.c.l.b16 %v171
    %v204 = vunpack.c.l.b16 %v172
    %v205 = vunpack.c.l.b16 %v173
    %v206 = vunpack.c.l.b16 %v174
    %v207 = vunpack.c.l.b16 %v175
    %v208 = vunpack.c.l.b16 %v176
    %v209 = vunpack.c.l.b16 %v177
    %v210 = vunpack.c.l.b16 %v178
    %v211 = vunpack.c.l.b16 %v179
    %v212 = vunpack.c.l.b16 %v180
    %v213 = vunpack.c.l.b16 %v181
    %v214 = vunpack.c.l.b16 %v182
    %v215 = vunpack.c.l.b16 %v183
    %v216 = vunpack.c.l.b16 %v184
    %v217 = vunpack.c.l.b16 %v185
    %v218 = vunpack.c.l.b16 %v186
    %v219 = vpack.c.b16 %v204, %v203
    %v220 = vpack.c.b16 %v206, %v205
    %v221 = vpack.c.b16 %v208, %v207
    %v222 = vpack.c.b16 %v210, %v209
    %v223 = vpack.c.b16 %v212, %v211
    %v224 = vpack.c.b16 %v214, %v213
    %v225 = vpack.c.b16 %v216, %v215
    %v226 = vpack.c.b16 %v218, %v217
    %235 = vmatprep.subr.bf16.mxu0 0
    %236 = vmatpush1.bf16.msra.mxu0 %v219
    %237 = vmatprep.subr.bf16.mxu0 0
    %238 = vmatpush1.bf16.msra.mxu0 %v220
    %239 = vmatprep.subr.bf16.mxu0 0
    %240 = vmatpush1.bf16.msra.mxu0 %v221
    %241 = vmatprep.subr.bf16.mxu0 0
    %242 = vmatpush1.bf16.msra.mxu0 %v222
    %243 = vmatprep.subr.bf16.mxu0 0
    %244 = vmatpush1.bf16.msra.mxu0 %v223
    %245 = vmatprep.subr.bf16.mxu0 0
    %246 = vmatpush1.bf16.msra.mxu0 %v224
    %247 = vmatprep.subr.bf16.mxu0 0
    %248 = vmatpush1.bf16.msra.mxu0 %v225
    %249 = vmatprep.subr.bf16.mxu0 0
    %250 = vmatpush1.bf16.msra.mxu0 %v226
    %251 = vmatprep.subr.bf16.mxu0 0
    %252 = vmatpush1.bf16.msra.mxu0 0
    %253 = vmatprep.subr.bf16.mxu0 0
    %254 = vmatpush1.bf16.msra.mxu0 0
    %255 = vmatprep.subr.bf16.mxu0 0
    %256 = vmatpush1.bf16.msra.mxu0 0
    %257 = vmatprep.subr.bf16.mxu0 0
    %258 = vmatpush1.bf16.msra.mxu0 0
    %259 = vmatprep.subr.bf16.mxu0 0
    %260 = vmatpush1.bf16.msra.mxu0 0
    %261 = vmatprep.subr.bf16.mxu0 0
    %262 = vmatpush1.bf16.msra.mxu0 0
    %263 = vmatprep.subr.bf16.mxu0 0
    %264 = vmatpush1.bf16.msra.mxu0 0
    %265 = vmatprep.subr.bf16.mxu0 0
    %266 = vmatpush1.bf16.msra.mxu0 0
    %267 = vmatprep.mubr.bf16.mxu0 0
    %268 = vmatmul.mubr.bf16.gmra.mrb[0].mxu0 %v170
    %v269 = vpop.f32.mrb[0].mxu0
    %v270 = vadd.f32 0.0, %v269
    %v271 = vpop.f32.mrb[0].mxu0
    %v272 = vpop.f32.mrb[0].mxu0
    %v273 = vpop.f32.mrb[0].mxu0
    %274 = vdwg.mxu0
    %v275 = vld [vmem:[%s4] sm:$0x1]
    %v277 = vlaneseq
    %v278 = vshrl.u32 %v277, 7
    %v279 = vsub.s32 0, %v278
    %v280 = vrot.slane %v275, %v279
    %v282 = vadd.f32 %v270, %v280
    %vm283 = vcmask 23552
    %284 = vst.msk [vmem:[%s5] sm:$0xff] %vm283, %v282
    // Predicated region
    $region34: #{classifier_forward.1} parent=1 // pred_check
      _
    $region35: #{classifier_forward.1} parent=1 // pred_check_branch
      %286 = sbr.rel (0) target = $region37
    $region36: #{classifier_forward.1} parent=1 // pred_region
      _
    $region37: #{classifier_forward.1} parent=1 // pred_fallthru
      _
    // Predicated region
    $region38: #{classifier_forward.1} parent=1 // pred_check
      _
    $region39: #{classifier_forward.1} parent=1 // pred_check_branch
      %288 = sbr.rel (0) target = $region41
    $region40: #{classifier_forward.1} parent=1 // pred_region
      _
    $region41: #{classifier_forward.1} parent=1 // pred_fallthru
      _
    %289 = vsyncpa [#allocation3], 1
    %290 = vsyncpa [#allocation5], 1

</llo_original>
